<compile_context>
chip_gen: v7x
topology: tpu7x:2x2x1
jax: 0.10.0
libtpu: 0.0.40
codegen_flags: <defaults>
</compile_context>

<pallas_src>
import jax
import jax.numpy as jnp
from jax.experimental import pallas as pl
from jax.experimental.pallas import tpu as pltpu


def _fused_stacked_gru_kernel(x_ref, h0_ref, w_ref, u_ref, b_ref, bhn_ref,
                              h1_ref, carry_ref):
    """One grid step == one GRU layer.

    x_ref     : (B, D_pad)    bf16   layer-0 input (zero padded to D_pad)
    h0_ref    : (1, B, H)     f32    this layer's initial hidden state
    w_ref     : (1, D_pad, 3H) bf16  input->gates weight (pre-transposed, row padded)
    u_ref     : (1, H, 3H)    bf16   hidden->gates weight (pre-transposed)
    b_ref     : (1, 1, 3H)    f32    [b_ih_r+b_hh_r | b_ih_z+b_hh_z | b_ih_n]
    bhn_ref   : (1, 1, H)     f32    b_hh_n (hidden bias of the "new" gate)
    h1_ref    : (1, B, H)     f32    this layer's new hidden state (output)
    carry_ref : (B, D_pad)    bf16   input carried to the next layer (scratch)
    """
    layer = pl.program_id(0)
    num_layers = pl.num_programs(0)
    hdim = h1_ref.shape[2]
    bsz, d_pad = carry_ref.shape

    # Seed the carried input with the external input at layer 0.
    @pl.when(layer == 0)
    def _():
        carry_ref[...] = x_ref[...].astype(carry_ref.dtype)

    inp = carry_ref[...]                     # (B, D_pad) bf16
    h = h0_ref[0].astype(jnp.float32)        # (B, H)     f32

    w = w_ref[0]                             # (D_pad, 3H) bf16
    u = u_ref[0]                             # (H, 3H)     bf16

    # MXU matmuls, f32 accumulation. Input-side biases (and the r/z hidden
    # biases) are folded into a single bias add.
    gi = jnp.dot(inp, w, preferred_element_type=jnp.float32) + b_ref[0]
    gh = jnp.dot(h.astype(u.dtype), u, preferred_element_type=jnp.float32)

    r = jax.nn.sigmoid(gi[:, :hdim] + gh[:, :hdim])
    z = jax.nn.sigmoid(gi[:, hdim:2 * hdim] + gh[:, hdim:2 * hdim])
    n = jnp.tanh(gi[:, 2 * hdim:] + r * (gh[:, 2 * hdim:] + bhn_ref[0]))

    h_new = (1.0 - z) * n + z * h
    h1_ref[0] = h_new.astype(h1_ref.dtype)

    # Carry this layer's output as the next layer's input.
    # Dropout between layers: eval-mode identity.
    # TODO(synk): stochastic train-mode dropout (Bernoulli mask) not implemented.
    @pl.when(layer + 1 < num_layers)
    def _():
        if d_pad == hdim:
            carry_ref[...] = h_new.astype(carry_ref.dtype)
        else:
            pad = jnp.zeros((bsz, d_pad - hdim), jnp.float32)
            carry_ref[...] = jnp.concatenate([h_new, pad], axis=1).astype(carry_ref.dtype)


def init_stacked_gru_params(key, num_layers, input_size, rnn_size, dtype=jnp.float32):
    """Per-layer params in PyTorch nn.GRUCell layout:
    weight_ih (3H, D_in), weight_hh (3H, H), bias_ih (3H,), bias_hh (3H,)."""
    params = []
    bound = 1.0 / float(rnn_size) ** 0.5
    d_in = input_size
    for _ in range(num_layers):
        key, k1, k2, k3, k4 = jax.random.split(key, 5)
        w_ih = jax.random.uniform(k1, (3 * rnn_size, d_in), dtype, -bound, bound)
        w_hh = jax.random.uniform(k2, (3 * rnn_size, rnn_size), dtype, -bound, bound)
        b_ih = jax.random.uniform(k3, (3 * rnn_size,), dtype, -bound, bound)
        b_hh = jax.random.uniform(k4, (3 * rnn_size,), dtype, -bound, bound)
        params.append((w_ih, w_hh, b_ih, b_hh))
        d_in = rnn_size
    return params


def prepare_params(params, input_size, rnn_size, weight_dtype=jnp.bfloat16):
    """Stack / transpose / pad / cast per-layer GRUCell params into kernel layout."""
    H = rnn_size
    d_pad = max(input_size, rnn_size)
    Ws, Us, Bs, Bhns = [], [], [], []
    for (w_ih, w_hh, b_ih, b_hh) in params:
        w_t = w_ih.T                                   # (d_in, 3H)
        d_in = w_t.shape[0]
        if d_in < d_pad:
            w_t = jnp.pad(w_t, ((0, d_pad - d_in), (0, 0)))
        Ws.append(w_t.astype(weight_dtype))
        Us.append(w_hh.T.astype(weight_dtype))         # (H, 3H)
        b_comb = jnp.concatenate([b_ih[:2 * H] + b_hh[:2 * H], b_ih[2 * H:]])
        Bs.append(b_comb.reshape(1, 3 * H).astype(jnp.float32))
        Bhns.append(b_hh[2 * H:].reshape(1, H).astype(jnp.float32))
    return (jnp.stack(Ws), jnp.stack(Us), jnp.stack(Bs), jnp.stack(Bhns))


def stacked_gru_forward(x, hidden, prepared):
    """Matches StackedGRU.forward: returns (output, (h_1,)).

    x:        (B, input_size)  f32
    hidden:   tuple of length 1 with h0 of shape (num_layers, B, rnn_size)
    prepared: output of prepare_params()
    """
    W, U, Bc, Bhn = prepared
    L, d_pad, H3 = W.shape
    H = H3 // 3
    h0 = hidden[0]
    B = x.shape[0]

    if x.shape[1] < d_pad:
        x = jnp.pad(x, ((0, 0), (0, d_pad - x.shape[1])))
    x = x.astype(W.dtype)

    h1 = pl.pallas_call(
        _fused_stacked_gru_kernel,
        out_shape=jax.ShapeDtypeStruct((L, B, H), h0.dtype),
        grid_spec=pltpu.PrefetchScalarGridSpec(
            num_scalar_prefetch=0,
            grid=(L,),
            in_specs=[
                pl.BlockSpec((B, d_pad), lambda l: (0, 0)),      # x (only used at l==0)
                pl.BlockSpec((1, B, H), lambda l: (l, 0, 0)),    # h0[l]
                pl.BlockSpec((1, d_pad, H3), lambda l: (l, 0, 0)),  # W[l]
                pl.BlockSpec((1, H, H3), lambda l: (l, 0, 0)),   # U[l]
                pl.BlockSpec((1, 1, H3), lambda l: (l, 0, 0)),   # combined bias[l]
                pl.BlockSpec((1, 1, H), lambda l: (l, 0, 0)),    # b_hh_n[l]
            ],
            out_specs=pl.BlockSpec((1, B, H), lambda l: (l, 0, 0)),
            scratch_shapes=[pltpu.VMEM((B, d_pad), W.dtype)],    # carried layer input
        ),
        compiler_params=pltpu.CompilerParams(
            dimension_semantics=("arbitrary",)),
    )(x, h0, W, U, Bc, Bhn)

    out = h1[L - 1]
    return out, (h1,)


def _reference_forward(x, h0, prepared):
    """Pure-JAX reference mirroring the kernel numerics (same bf16 weights)."""
    W, U, Bc, Bhn = prepared
    L, d_pad, H3 = W.shape
    H = H3 // 3
    B = x.shape[0]
    if x.shape[1] < d_pad:
        x = jnp.pad(x, ((0, 0), (0, d_pad - x.shape[1])))
    inp = x.astype(W.dtype)
    hs = []
    for l in range(L):
        h = h0[l].astype(jnp.float32)
        gi = jnp.dot(inp, W[l], preferred_element_type=jnp.float32) + Bc[l]
        gh = jnp.dot(h.astype(U.dtype), U[l], preferred_element_type=jnp.float32)
        r = jax.nn.sigmoid(gi[:, :H] + gh[:, :H])
        z = jax.nn.sigmoid(gi[:, H:2 * H] + gh[:, H:2 * H])
        n = jnp.tanh(gi[:, 2 * H:] + r * (gh[:, 2 * H:] + Bhn[l]))
        h_new = (1.0 - z) * n + z * h
        hs.append(h_new)
        if d_pad == H:
            inp = h_new.astype(W.dtype)
        else:
            pad = jnp.zeros((B, d_pad - H), jnp.float32)
            inp = jnp.concatenate([h_new, pad], axis=1).astype(W.dtype)
    h1 = jnp.stack(hs, axis=0)
    return hs[-1], h1


if __name__ == "__main__":
    num_layers = 3
    batch = 8
    input_size = 128
    rnn_size = 128
    dropout = 0.3  # identity (eval mode)

    key = jax.random.PRNGKey(0)
    kx, kh, kp = jax.random.split(key, 3)

    x = jax.random.normal(kx, (batch, input_size), jnp.float32)
    h0 = jax.random.normal(kh, (num_layers, batch, rnn_size), jnp.float32)

    raw_params = init_stacked_gru_params(kp, num_layers, input_size, rnn_size)
    prepared = prepare_params(raw_params, input_size, rnn_size)

    out, (h_1,) = stacked_gru_forward(x, (h0,), prepared)
    out = jax.block_until_ready(out)
    h_1 = jax.block_until_ready(h_1)

    ref_out, ref_h1 = _reference_forward(x, h0, prepared)

    assert out.shape == (batch, rnn_size)
    assert h_1.shape == (num_layers, batch, rnn_size)
    assert jnp.allclose(out, ref_out, atol=5e-3, rtol=5e-3), "output mismatch"
    assert jnp.allclose(h_1, ref_h1, atol=5e-3, rtol=5e-3), "h_1 mismatch"

    print("KERNEL_OK")
</pallas_src>

<mosaic_0001>
module attributes {stable_mosaic.version = 11 : i64} {
  func.func @_fused_stacked_gru_kernel(%arg0: i32, %arg1: memref<8x128xbf16, #tpu.memory_space<vmem>>, %arg2: memref<1x8x128xf32, #tpu.memory_space<vmem>>, %arg3: memref<1x128x384xbf16, #tpu.memory_space<vmem>>, %arg4: memref<1x128x384xbf16, #tpu.memory_space<vmem>>, %arg5: memref<1x1x384xf32, #tpu.memory_space<vmem>>, %arg6: memref<1x1x128xf32, #tpu.memory_space<vmem>>, %arg7: memref<1x8x128xf32, #tpu.memory_space<vmem>>, %arg8: memref<8x128xbf16, #tpu.memory_space<vmem>>) attributes {dimension_semantics = [#tpu.dimension_semantics<arbitrary>], iteration_bounds = array<i64: 3>, scalar_prefetch = 0 : i64, scratch_operands = 1 : i64, tpu.core_type = #tpu.core_type<tc>, window_params = [{pipeline_mode = #tpu.pipeline_mode<synchronous>, transform_indices = @transform_0, window_bounds = array<i64: 8, 128>}, {transform_indices = @transform_1, window_bounds = array<i64: 1, 8, 128>}, {transform_indices = @transform_2, window_bounds = array<i64: 1, 128, 384>}, {transform_indices = @transform_3, window_bounds = array<i64: 1, 128, 384>}, {transform_indices = @transform_4, window_bounds = array<i64: 1, 1, 384>}, {transform_indices = @transform_5, window_bounds = array<i64: 1, 1, 128>}, {transform_indices = @transform_6, window_bounds = array<i64: 1, 8, 128>}]} {
    %c0_i32 = arith.constant 0 : i32
    %0 = arith.cmpi eq, %arg0, %c0_i32 : i32
    %1 = arith.extui %0 : i1 to i32
    %c0_i32_0 = arith.constant 0 : i32
    %2 = arith.cmpi ne, %1, %c0_i32_0 : i32
    scf.if %2 {
      %c0_25 = arith.constant 0 : index
      %c0_26 = arith.constant 0 : index
      %54 = vector.load %arg1[%c0_25, %c0_26] : memref<8x128xbf16, #tpu.memory_space<vmem>>, vector<8x128xbf16>
      %c0_27 = arith.constant 0 : index
      %c0_28 = arith.constant 0 : index
      %55 = vector.load %arg8[%c0_27, %c0_28] : memref<8x128xbf16, #tpu.memory_space<vmem>>, vector<8x128xbf16>
      tpu.vector_store %arg8[%c0_27, %c0_28], %54 {strides = array<i32>} : memref<8x128xbf16, #tpu.memory_space<vmem>>, vector<8x128xbf16>,
    } else {
    }
    %c0 = arith.constant 0 : index
    %c0_1 = arith.constant 0 : index
    %3 = vector.load %arg8[%c0, %c0_1] : memref<8x128xbf16, #tpu.memory_space<vmem>>, vector<8x128xbf16>
    %c0_2 = arith.constant 0 : index
    %c0_3 = arith.constant 0 : index
    %c0_4 = arith.constant 0 : index
    %4 = vector.load %arg2[%c0_2, %c0_3, %c0_4] : memref<1x8x128xf32, #tpu.memory_space<vmem>>, vector<1x8x128xf32>
    %5 = vector.shape_cast %4 : vector<1x8x128xf32> to vector<8x128xf32>
    %c0_5 = arith.constant 0 : index
    %c0_6 = arith.constant 0 : index
    %c0_7 = arith.constant 0 : index
    %6 = vector.load %arg3[%c0_5, %c0_6, %c0_7] : memref<1x128x384xbf16, #tpu.memory_space<vmem>>, vector<1x128x384xbf16>
    %7 = vector.shape_cast %6 : vector<1x128x384xbf16> to vector<128x384xbf16>
    %c0_8 = arith.constant 0 : index
    %c0_9 = arith.constant 0 : index
    %c0_10 = arith.constant 0 : index
    %8 = vector.load %arg4[%c0_8, %c0_9, %c0_10] : memref<1x128x384xbf16, #tpu.memory_space<vmem>>, vector<1x128x384xbf16>
    %9 = vector.shape_cast %8 : vector<1x128x384xbf16> to vector<128x384xbf16>
    %cst = arith.constant dense<0.000000e+00> : vector<8x384xf32>
    %10 = tpu.matmul %3, %7, %cst {dimension_numbers = #tpu.dot_dimension_numbers<[1], [0], [0], [1], [0, 0, 1, 1], [], []>} : vector<8x128xbf16>, vector<128x384xbf16>, vector<8x384xf32> -> vector<8x384xf32>
    %c0_11 = arith.constant 0 : index
    %c0_12 = arith.constant 0 : index
    %c0_13 = arith.constant 0 : index
    %11 = vector.load %arg5[%c0_11, %c0_12, %c0_13] : memref<1x1x384xf32, #tpu.memory_space<vmem>>, vector<1x1x384xf32>
    %12 = vector.shape_cast %11 : vector<1x1x384xf32> to vector<1x384xf32>
    %13 = vector.broadcast %12 : vector<1x384xf32> to vector<8x384xf32>
    %14 = arith.addf %10, %13 : vector<8x384xf32>
    %15 = arith.truncf %5 : vector<8x128xf32> to vector<8x128xbf16>
    %cst_14 = arith.constant dense<0.000000e+00> : vector<8x384xf32>
    %16 = tpu.matmul %15, %9, %cst_14 {dimension_numbers = #tpu.dot_dimension_numbers<[1], [0], [0], [1], [0, 0, 1, 1], [], []>} : vector<8x128xbf16>, vector<128x384xbf16>, vector<8x384xf32> -> vector<8x384xf32>
    %17 = vector.extract_strided_slice %14 {offsets = [0, 0], sizes = [8, 128], strides = [1, 1]} : vector<8x384xf32> to vector<8x128xf32>
    %18 = vector.extract_strided_slice %16 {offsets = [0, 0], sizes = [8, 128], strides = [1, 1]} : vector<8x384xf32> to vector<8x128xf32>
    %19 = arith.addf %17, %18 : vector<8x128xf32>
    %20 = arith.negf %19 : vector<8x128xf32>
    %21 = math.exp %20 : vector<8x128xf32>
    %cst_15 = arith.constant 1.000000e+00 : f32
    %22 = vector.broadcast %cst_15 : f32 to vector<8x128xf32>
    %23 = arith.addf %22, %21 : vector<8x128xf32>
    %24 = arith.divf %22, %23 : vector<8x128xf32>
    %25 = vector.extract_strided_slice %14 {offsets = [0, 128], sizes = [8, 128], strides = [1, 1]} : vector<8x384xf32> to vector<8x128xf32>
    %26 = vector.extract_strided_slice %16 {offsets = [0, 128], sizes = [8, 128], strides = [1, 1]} : vector<8x384xf32> to vector<8x128xf32>
    %27 = arith.addf %25, %26 : vector<8x128xf32>
    %28 = arith.negf %27 : vector<8x128xf32>
    %29 = math.exp %28 : vector<8x128xf32>
    %cst_16 = arith.constant 1.000000e+00 : f32
    %30 = vector.broadcast %cst_16 : f32 to vector<8x128xf32>
    %31 = arith.addf %30, %29 : vector<8x128xf32>
    %32 = arith.divf %30, %31 : vector<8x128xf32>
    %33 = vector.extract_strided_slice %14 {offsets = [0, 256], sizes = [8, 128], strides = [1, 1]} : vector<8x384xf32> to vector<8x128xf32>
    %34 = vector.extract_strided_slice %16 {offsets = [0, 256], sizes = [8, 128], strides = [1, 1]} : vector<8x384xf32> to vector<8x128xf32>
    %c0_17 = arith.constant 0 : index
    %c0_18 = arith.constant 0 : index
    %c0_19 = arith.constant 0 : index
    %35 = vector.load %arg6[%c0_17, %c0_18, %c0_19] : memref<1x1x128xf32, #tpu.memory_space<vmem>>, vector<1x1x128xf32>
    %36 = vector.shape_cast %35 : vector<1x1x128xf32> to vector<1x128xf32>
    %37 = vector.broadcast %36 : vector<1x128xf32> to vector<8x128xf32>
    %38 = arith.addf %34, %37 : vector<8x128xf32>
    %39 = arith.mulf %24, %38 : vector<8x128xf32>
    %40 = arith.addf %33, %39 : vector<8x128xf32>
    %41 = math.tanh %40 : vector<8x128xf32>
    %cst_20 = arith.constant 1.000000e+00 : f32
    %42 = vector.broadcast %cst_20 : f32 to vector<8x128xf32>
    %43 = arith.subf %42, %32 : vector<8x128xf32>
    %44 = arith.mulf %43, %41 : vector<8x128xf32>
    %45 = arith.mulf %32, %5 : vector<8x128xf32>
    %46 = arith.addf %44, %45 : vector<8x128xf32>
    %c0_21 = arith.constant 0 : index
    %c0_22 = arith.constant 0 : index
    %c0_23 = arith.constant 0 : index
    %47 = vector.load %arg7[%c0_21, %c0_22, %c0_23] : memref<1x8x128xf32, #tpu.memory_space<vmem>>, vector<1x8x128xf32>
    %48 = vector.shape_cast %47 : vector<1x8x128xf32> to vector<8x128xf32>
    %49 = vector.shape_cast %46 : vector<8x128xf32> to vector<1x8x128xf32>
    tpu.vector_store %arg7[%c0_21, %c0_22, %c0_23], %49 {strides = array<i32>} : memref<1x8x128xf32, #tpu.memory_space<vmem>>, vector<1x8x128xf32>,
    %c1_i32 = arith.constant 1 : i32
    %50 = arith.addi %arg0, %c1_i32 : i32
    %c3_i32 = arith.constant 3 : i32
    %51 = arith.cmpi slt, %50, %c3_i32 : i32
    %52 = arith.extui %51 : i1 to i32
    %c0_i32_24 = arith.constant 0 : i32
    %53 = arith.cmpi ne, %52, %c0_i32_24 : i32
    scf.if %53 {
      %54 = arith.truncf %46 : vector<8x128xf32> to vector<8x128xbf16>
      %c0_25 = arith.constant 0 : index
      %c0_26 = arith.constant 0 : index
      %55 = vector.load %arg8[%c0_25, %c0_26] : memref<8x128xbf16, #tpu.memory_space<vmem>>, vector<8x128xbf16>
      tpu.vector_store %arg8[%c0_25, %c0_26], %54 {strides = array<i32>} : memref<8x128xbf16, #tpu.memory_space<vmem>>, vector<8x128xbf16>,
    } else {
    }
    return
  }
  func.func @transform_0(%arg0: i32) -> (i32, i32) {
    %c0_i32 = arith.constant 0 : i32
    %c0_i32_0 = arith.constant 0 : i32
    %c0_i32_1 = arith.constant 0 : i32
    return %c0_i32, %c0_i32_0 : i32, i32
  }
  func.func @transform_1(%arg0: i32) -> (i32, i32, i32) {
    %c0_i32 = arith.constant 0 : i32
    %c0_i32_0 = arith.constant 0 : i32
    %c0_i32_1 = arith.constant 0 : i32
    return %arg0, %c0_i32, %c0_i32_0 : i32, i32, i32
  }
  func.func @transform_2(%arg0: i32) -> (i32, i32, i32) {
    %c0_i32 = arith.constant 0 : i32
    %c0_i32_0 = arith.constant 0 : i32
    %c0_i32_1 = arith.constant 0 : i32
    return %arg0, %c0_i32, %c0_i32_0 : i32, i32, i32
  }
  func.func @transform_3(%arg0: i32) -> (i32, i32, i32) {
    %c0_i32 = arith.constant 0 : i32
    %c0_i32_0 = arith.constant 0 : i32
    %c0_i32_1 = arith.constant 0 : i32
    return %arg0, %c0_i32, %c0_i32_0 : i32, i32, i32
  }
  func.func @transform_4(%arg0: i32) -> (i32, i32, i32) {
    %c0_i32 = arith.constant 0 : i32
    %c0_i32_0 = arith.constant 0 : i32
    %c0_i32_1 = arith.constant 0 : i32
    return %arg0, %c0_i32, %c0_i32_0 : i32, i32, i32
  }
  func.func @transform_5(%arg0: i32) -> (i32, i32, i32) {
    %c0_i32 = arith.constant 0 : i32
    %c0_i32_0 = arith.constant 0 : i32
    %c0_i32_1 = arith.constant 0 : i32
    return %arg0, %c0_i32, %c0_i32_0 : i32, i32, i32
  }
  func.func @transform_6(%arg0: i32) -> (i32, i32, i32) {
    %c0_i32 = arith.constant 0 : i32
    %c0_i32_0 = arith.constant 0 : i32
    %c0_i32_1 = arith.constant 0 : i32
    return %arg0, %c0_i32, %c0_i32_0 : i32, i32, i32
  }
}

</mosaic_0001>

<llo_original>
// kernel: tpu_custom_call.1
$region0: #{tpu_custom_call.1}
  #allocation0 [shape = 'u32[]', space=smem, size = 0x4, offset = 0x4, fixed_abs, tag = 'smem constant byte address 0x4 - core index']
  #allocation1 [shape = 'u32[144,128]{1,0:T(1,128)}', space=vmem, size = 0x12000, scoped, tag = 'internal scratch']
  #allocation2 [shape = 'bf16[8,128]{1,0:T(8,128)(2,1)}', space=vmem, size = 0x800, scoped, tag = 'scratch operand']
  %s0 = inlined_call_operand.hbm [shape: bf16[8,128], index: 0, kind: input, shape index: {}]
  %s1 = inlined_call_operand.hbm [shape: f32[3,8,128], index: 1, kind: input, shape index: {}]
  %s2 = inlined_call_operand.hbm [shape: bf16[3,128,384], index: 2, kind: input, shape index: {}]
  %s3 = inlined_call_operand.hbm [shape: bf16[3,128,384], index: 3, kind: input, shape index: {}]
  %s4 = inlined_call_operand.vmem [shape: f32[3,1,384], index: 4, kind: input, shape index: {}]
  %s5 = inlined_call_operand.vmem [shape: f32[3,1,128], index: 5, kind: input, shape index: {}]
  %s6 = inlined_call_operand.hbm [shape: f32[3,8,128], index: 6, kind: output, shape index: {}]
  %s7 = sld [smem:[#allocation0]]
  $region81: #{tpu_custom_call.1} parent=0
    _
  %s9 = ssub.s32 1, %s7
  %s10 = scalar_select 0, %s9, %s7
  $region1: #{tpu_custom_call.1} parent=0
    #allocation3 [shape = 'u8[2048]{0}', space=vmem, size = 0x800, scoped, tag = 'input window, operand 0, single buffered']
    #allocation4 [shape = 's32[2]{0}', space=sflag, size = 0x8, scoped, tag = 'scoped memory for tpu_custom_call.1']
    #allocation5 [shape = 's32[2]{0}', space=sflag, size = 0x8, scoped, tag = 'scoped memory for tpu_custom_call.1']
    #allocation6 [shape = 'u8[8192]{0}', space=vmem, size = 0x2000, scoped, tag = 'input window, operand 1']
    #allocation7 [shape = 's32[2]{0}', space=sflag, size = 0x8, scoped, tag = 'scoped memory for tpu_custom_call.1']
    #allocation8 [shape = 'u8[196608]{0}', space=vmem, size = 0x30000, scoped, tag = 'input window, operand 2']
    #allocation9 [shape = 'u8[196608]{0}', space=vmem, size = 0x30000, scoped, tag = 'input window, operand 3']
    #allocation10 [shape = 's32[2]{0}', space=sflag, size = 0x8, scoped, tag = 'scoped memory for tpu_custom_call.1']
    #allocation11 [shape = 'u8[8192]{0}', space=vmem, size = 0x2000, scoped, tag = 'output window, operand 0']
    %11 = vsyncpa [#allocation4], 0
    %12 = vsyncpa [#allocation7], 0
    %s13 = scalar_lea.sflag [#allocation7], 1
    %14 = vsyncpa %s13, 0
    %15 = vsyncpa [#allocation10], 0
    %s16 = scalar_lea.sflag [#allocation10], 1
    %17 = vsyncpa %s16, 0
    %18 = vsyncpa [#allocation5], 0
    %s19 = scalar_lea.sflag [#allocation5], 1
    %20 = vsyncpa %s19, 0
    loop: start=0, step=1, limit=5
    $region2: #{tpu_custom_call.1} parent=1 // loop_pre_header
      _
    $region3: #{tpu_custom_call.1} parent=1 // loop_header
      %s22 = sphi 0, %s26
      %p23 = scmp.ge.s32.totalorder %s22, 5
      %s30 = sphi 0, %s30
      %s32 = sphi 0, %s30
      %s33 = sphi 0, %s32
      %s47 = sphi 0, %s33
      %s53 = sphi 0, %s55
      %s56 = sphi 0, %s53
      %s57 = sphi 0, %s56
      %s73 = sphi 0, %s57
      %s79 = sphi 0, %s81
      %s82 = sphi 0, %s79
      %s83 = sphi 0, %s82
      %s99 = sphi 0, %s83
      %s105 = sphi 0, %s107
      %s108 = sphi 0, %s105
      %s109 = sphi 0, %s108
      %s125 = sphi 0, %s109
      %s131 = sphi 0, %s133
      %s134 = sphi 0, %s131
      %s135 = sphi 0, %s134
      %s151 = sphi 0, %s135
      %s157 = sphi 0, %s159
      %s160 = sphi 0, %s157
      %s161 = sphi 0, %s160
      %s177 = sphi 0, %s161
      %s183 = sphi 0, %s185
      %s186 = sphi 0, %s183
      %s187 = sphi 0, %s186
      %s203 = sphi 0, %s187
    $region4: #{tpu_custom_call.1} parent=1 // loop_header_branch
      %25 = sbr.rel (%p23) target = $region8
    $region5: #{tpu_custom_call.1} parent=1 // loop_body
      %s27 = ssub.s32 %s22, 1
      %s28 = ssub.s32 %s22, 2
      %s29 = sadd.s32 %s22, 1
      %s31 = sadd.s32 %s30, 1
      %p34 = scmp.eq.s32.totalorder %s22, 2
      %p35 = scmp.ne.s32.totalorder %s30, %s32
      %p36 = scmp.eq.s32.totalorder %s22, 0
      %p37 = por %p35, %p36
      %p38 = scmp.ne.s32.totalorder %s30, %s32
      %p39 = scmp.eq.s32.totalorder %s27, 2
      %p40 = por %p38, %p39
      %p41 = scmp.ne.s32.totalorder %s32, %s33
      %p42 = scmp.eq.s32.totalorder %s27, 0
      %p43 = por %p41, %p42
      %p44 = scmp.ne.s32.totalorder %s32, %s33
      %p45 = scmp.eq.s32.totalorder %s28, 2
      %p46 = por %p44, %p45
      %p48 = scmp.ne.s32.totalorder %s33, %s47
      %p49 = scmp.eq.s32.totalorder %s28, 0
      %p50 = por %p48, %p49
      %s51 = ssub.s32 %s22, %s29
      %p52 = scmp.eq.s32.totalorder %s51, 0
      %s54 = sadd.s32 %s53, 1
      %s55 = scalar_select %p52, %s53, %s54
      %p58 = pneg %p52
      %p59 = scmp.eq.s32.totalorder %s22, 2
      %p60 = por %p58, %p59
      %p61 = scmp.ne.s32.totalorder %s53, %s56
      %p62 = scmp.eq.s32.totalorder %s22, 0
      %p63 = por %p61, %p62
      %p64 = scmp.ne.s32.totalorder %s53, %s56
      %p65 = scmp.eq.s32.totalorder %s27, 2
      %p66 = por %p64, %p65
      %p67 = scmp.ne.s32.totalorder %s56, %s57
      %p68 = scmp.eq.s32.totalorder %s27, 0
      %p69 = por %p67, %p68
      %p70 = scmp.ne.s32.totalorder %s56, %s57
      %p71 = scmp.eq.s32.totalorder %s28, 2
      %p72 = por %p70, %p71
      %p74 = scmp.ne.s32.totalorder %s57, %s73
      %p75 = scmp.eq.s32.totalorder %s28, 0
      %p76 = por %p74, %p75
      %s77 = ssub.s32 %s22, %s29
      %p78 = scmp.eq.s32.totalorder %s77, 0
      %s80 = sadd.s32 %s79, 1
      %s81 = scalar_select %p78, %s79, %s80
      %p84 = pneg %p78
      %p85 = scmp.eq.s32.totalorder %s22, 2
      %p86 = por %p84, %p85
      %p87 = scmp.ne.s32.totalorder %s79, %s82
      %p88 = scmp.eq.s32.totalorder %s22, 0
      %p89 = por %p87, %p88
      %p90 = scmp.ne.s32.totalorder %s79, %s82
      %p91 = scmp.eq.s32.totalorder %s27, 2
      %p92 = por %p90, %p91
      %p93 = scmp.ne.s32.totalorder %s82, %s83
      %p94 = scmp.eq.s32.totalorder %s27, 0
      %p95 = por %p93, %p94
      %p96 = scmp.ne.s32.totalorder %s82, %s83
      %p97 = scmp.eq.s32.totalorder %s28, 2
      %p98 = por %p96, %p97
      %p100 = scmp.ne.s32.totalorder %s83, %s99
      %p101 = scmp.eq.s32.totalorder %s28, 0
      %p102 = por %p100, %p101
      %s103 = ssub.s32 %s22, %s29
      %p104 = scmp.eq.s32.totalorder %s103, 0
      %s106 = sadd.s32 %s105, 1
      %s107 = scalar_select %p104, %s105, %s106
      %p110 = pneg %p104
      %p111 = scmp.eq.s32.totalorder %s22, 2
      %p112 = por %p110, %p111
      %p113 = scmp.ne.s32.totalorder %s105, %s108
      %p114 = scmp.eq.s32.totalorder %s22, 0
      %p115 = por %p113, %p114
      %p116 = scmp.ne.s32.totalorder %s105, %s108
      %p117 = scmp.eq.s32.totalorder %s27, 2
      %p118 = por %p116, %p117
      %p119 = scmp.ne.s32.totalorder %s108, %s109
      %p120 = scmp.eq.s32.totalorder %s27, 0
      %p121 = por %p119, %p120
      %p122 = scmp.ne.s32.totalorder %s108, %s109
      %p123 = scmp.eq.s32.totalorder %s28, 2
      %p124 = por %p122, %p123
      %p126 = scmp.ne.s32.totalorder %s109, %s125
      %p127 = scmp.eq.s32.totalorder %s28, 0
      %p128 = por %p126, %p127
      %s129 = ssub.s32 %s22, %s29
      %p130 = scmp.eq.s32.totalorder %s129, 0
      %s132 = sadd.s32 %s131, 1
      %s133 = scalar_select %p130, %s131, %s132
      %p136 = pneg %p130
      %p137 = scmp.eq.s32.totalorder %s22, 2
      %p138 = por %p136, %p137
      %p139 = scmp.ne.s32.totalorder %s131, %s134
      %p140 = scmp.eq.s32.totalorder %s22, 0
      %p141 = por %p139, %p140
      %p142 = scmp.ne.s32.totalorder %s131, %s134
      %p143 = scmp.eq.s32.totalorder %s27, 2
      %p144 = por %p142, %p143
      %p145 = scmp.ne.s32.totalorder %s134, %s135
      %p146 = scmp.eq.s32.totalorder %s27, 0
      %p147 = por %p145, %p146
      %p148 = scmp.ne.s32.totalorder %s134, %s135
      %p149 = scmp.eq.s32.totalorder %s28, 2
      %p150 = por %p148, %p149
      %p152 = scmp.ne.s32.totalorder %s135, %s151
      %p153 = scmp.eq.s32.totalorder %s28, 0
      %p154 = por %p152, %p153
      %s155 = ssub.s32 %s22, %s29
      %p156 = scmp.eq.s32.totalorder %s155, 0
      %s158 = sadd.s32 %s157, 1
      %s159 = scalar_select %p156, %s157, %s158
      %p162 = pneg %p156
      %p163 = scmp.eq.s32.totalorder %s22, 2
      %p164 = por %p162, %p163
      %p165 = scmp.ne.s32.totalorder %s157, %s160
      %p166 = scmp.eq.s32.totalorder %s22, 0
      %p167 = por %p165, %p166
      %p168 = scmp.ne.s32.totalorder %s157, %s160
      %p169 = scmp.eq.s32.totalorder %s27, 2
      %p170 = por %p168, %p169
      %p171 = scmp.ne.s32.totalorder %s160, %s161
      %p172 = scmp.eq.s32.totalorder %s27, 0
      %p173 = por %p171, %p172
      %p174 = scmp.ne.s32.totalorder %s160, %s161
      %p175 = scmp.eq.s32.totalorder %s28, 2
      %p176 = por %p174, %p175
      %p178 = scmp.ne.s32.totalorder %s161, %s177
      %p179 = scmp.eq.s32.totalorder %s28, 0
      %p180 = por %p178, %p179
      %s181 = ssub.s32 %s22, %s29
      %p182 = scmp.eq.s32.totalorder %s181, 0
      %s184 = sadd.s32 %s183, 1
      %s185 = scalar_select %p182, %s183, %s184
      %p188 = pneg %p182
      %p189 = scmp.eq.s32.totalorder %s22, 2
      %p190 = por %p188, %p189
      %p191 = scmp.ne.s32.totalorder %s183, %s186
      %p192 = scmp.eq.s32.totalorder %s22, 0
      %p193 = por %p191, %p192
      %p194 = scmp.ne.s32.totalorder %s183, %s186
      %p195 = scmp.eq.s32.totalorder %s27, 2
      %p196 = por %p194, %p195
      %p197 = scmp.ne.s32.totalorder %s186, %s187
      %p198 = scmp.eq.s32.totalorder %s27, 0
      %p199 = por %p197, %p198
      %p200 = scmp.ne.s32.totalorder %s186, %s187
      %p201 = scmp.eq.s32.totalorder %s28, 2
      %p202 = por %p200, %p201
      %p204 = scmp.ne.s32.totalorder %s187, %s203
      %p205 = scmp.eq.s32.totalorder %s28, 0
      %p206 = por %p204, %p205
      %p207 = scmp.le.s32.totalorder 1, %s22
      %p208 = scmp.lt.s32.totalorder %s22, 4
      %p209 = pnand %p207, %p208
      %p210 = pneg %p209
      // Predicated region
      $region9: #{tpu_custom_call.1} parent=5 // pred_check
        _
      $region10: #{tpu_custom_call.1} parent=5 // pred_check_branch
        %212 = sbr.rel (%p209) target = $region12
      $region11: #{tpu_custom_call.1} parent=5 // pred_region
        %s213 = ssub.s32 %s22, 1
        // Predicated region
        $region13: #{tpu_custom_call.1} parent=11 // pred_check
          %p214 = pneg %p43
        $region14: #{tpu_custom_call.1} parent=11 // pred_check_branch
          %216 = sbr.rel (%p214) target = $region16
        $region15: #{tpu_custom_call.1} parent=11 // pred_region
          %s218 = ssub.s32 64, 64
          %219 = vsyncadd [#allocation4], %s218
          %s221 = sshll.u32 [#allocation3], 4
          %s222 = int_to_ptr.vmem [resolvable:$true] %s221
          %224 = dma.hbm_to_vmem [thread:$0]  %s0, 64, %s222, [#allocation4]
        $region16: #{tpu_custom_call.1} parent=11 // pred_fallthru
          _
      $region12: #{tpu_custom_call.1} parent=5 // pred_fallthru
        _
      %p225 = scmp.lt.s32.totalorder %s22, 3
      // Predicated region
      $region17: #{tpu_custom_call.1} parent=5 // pred_check
        %p226 = pneg %p225
      $region18: #{tpu_custom_call.1} parent=5 // pred_check_branch
        %228 = sbr.rel (%p226) target = $region20
      $region19: #{tpu_custom_call.1} parent=5 // pred_region
        // Predicated region
        $region21: #{tpu_custom_call.1} parent=19 // pred_check
          %p229 = pneg %p63
        $region22: #{tpu_custom_call.1} parent=19 // pred_check_branch
          %231 = sbr.rel (%p229) target = $region24
        $region23: #{tpu_custom_call.1} parent=19 // pred_region
          %s232 = sand.u32 %s22, 1
          %s233 = scalar_lea.sflag [#allocation7], %s232
          %s234 = sand.u32 %s53, 1
          %s235 = smul.addr %s234, 8
          %s236 = scalar_lea.vmem [#allocation6], %s235
          %s238 = ssub.s32 128, 128
          %239 = vsyncadd %s233, %s238
          %s240 = smul.addr %s22, 128
          %s241 = scalar_lea.hbm %s1, %s240
          %s243 = sshll.u32 %s236, 4
          %s244 = int_to_ptr.vmem [resolvable:$true] %s243
          %246 = dma.hbm_to_vmem [thread:$0]  %s241, 128, %s244, %s233
        $region24: #{tpu_custom_call.1} parent=19 // pred_fallthru
          _
        // Predicated region
        $region25: #{tpu_custom_call.1} parent=19 // pred_check
          %p247 = pneg %p89
        $region26: #{tpu_custom_call.1} parent=19 // pred_check_branch
          %249 = sbr.rel (%p247) target = $region28
        $region27: #{tpu_custom_call.1} parent=19 // pred_region
          %s250 = sand.u32 %s22, 1
          %s251 = scalar_lea.sflag [#allocation7], %s250
          %s252 = sand.u32 %s79, 1
          %s253 = smul.addr %s252, 192
          %s254 = scalar_lea.vmem [#allocation8], %s253
          %s256 = ssub.s32 3072, 3072
          %257 = vsyncadd %s251, %s256
          %s258 = smul.addr %s22, 48
          %s259 = smul.addr %s258, 64
          %s260 = scalar_lea.hbm %s2, %s259
          %s261 = sshll.u32 %s254, 4
          %s262 = int_to_ptr.vmem [resolvable:$true] %s261
          %267 = dma.hbm_to_vmem [thread:$0]  %s260, 3072, %s262, %s251, 192, 192, 12
        $region28: #{tpu_custom_call.1} parent=19 // pred_fallthru
          _
        // Predicated region
        $region29: #{tpu_custom_call.1} parent=19 // pred_check
          %p268 = pneg %p115
        $region30: #{tpu_custom_call.1} parent=19 // pred_check_branch
          %270 = sbr.rel (%p268) target = $region32
        $region31: #{tpu_custom_call.1} parent=19 // pred_region
          %s271 = sand.u32 %s105, 1
          %s272 = scalar_lea.sflag [#allocation10], %s271
          %s273 = sand.u32 %s105, 1
          %s274 = smul.addr %s273, 192
          %s275 = scalar_lea.vmem [#allocation9], %s274
          %s277 = ssub.s32 3072, 3072
          %278 = vsyncadd %s272, %s277
          %s279 = smul.addr %s22, 48
          %s280 = smul.addr %s279, 64
          %s281 = scalar_lea.hbm %s3, %s280
          %s282 = sshll.u32 %s275, 4
          %s283 = int_to_ptr.vmem [resolvable:$true] %s282
          %288 = dma.hbm_to_vmem [thread:$0]  %s281, 3072, %s283, %s272, 192, 192, 12
        $region32: #{tpu_custom_call.1} parent=19 // pred_fallthru
          _
        // Predicated region
        $region33: #{tpu_custom_call.1} parent=19 // pred_check
          %p289 = pneg %p141
        $region34: #{tpu_custom_call.1} parent=19 // pred_check_branch
          %291 = sbr.rel (%p289) target = $region36
        $region35: #{tpu_custom_call.1} parent=19 // pred_region
          %p292 = scmp.lt.s32.totalorder %s22, 2
          %s293 = scalar_select %p292, %s22, 2
          %s294 = smul.addr %s293, 3
          %s295 = scalar_lea.vmem %s4, %s294
        $region36: #{tpu_custom_call.1} parent=19 // pred_fallthru
          _
        // Predicated region
        $region37: #{tpu_custom_call.1} parent=19 // pred_check
          %p296 = pneg %p167
        $region38: #{tpu_custom_call.1} parent=19 // pred_check_branch
          %298 = sbr.rel (%p296) target = $region40
        $region39: #{tpu_custom_call.1} parent=19 // pred_region
          %p299 = scmp.lt.s32.totalorder %s22, 2
          %s300 = scalar_select %p299, %s22, 2
          %s301 = scalar_lea.vmem %s5, %s300
        $region40: #{tpu_custom_call.1} parent=19 // pred_fallthru
          _
      $region20: #{tpu_custom_call.1} parent=5 // pred_fallthru
        _
      %p302 = scmp.le.s32.totalorder 1, %s22
      %p303 = scmp.lt.s32.totalorder %s22, 4
      %p304 = pnand %p302, %p303
      %p305 = pneg %p304
      // Predicated region
      $region41: #{tpu_custom_call.1} parent=5 // pred_check
        _
      $region42: #{tpu_custom_call.1} parent=5 // pred_check_branch
        %307 = sbr.rel (%p304) target = $region44
      $region43: #{tpu_custom_call.1} parent=5 // pred_region
        %s308 = ssub.s32 %s22, 1
        // Predicated region
        $region45: #{tpu_custom_call.1} parent=43 // pred_check
          %p309 = pneg %p43
        $region46: #{tpu_custom_call.1} parent=43 // pred_check_branch
          %311 = sbr.rel (%p309) target = $region48
        $region47: #{tpu_custom_call.1} parent=43 // pred_region
          %312 = dma.done [#allocation4], 64
        $region48: #{tpu_custom_call.1} parent=43 // pred_fallthru
          _
        %s313 = sand.u32 %s27, 1
        %s314 = scalar_lea.sflag [#allocation7], %s313
        %s315 = sand.u32 %s56, 1
        %s316 = smul.addr %s315, 8
        %s317 = scalar_lea.vmem [#allocation6], %s316
        // Predicated region
        $region49: #{tpu_custom_call.1} parent=43 // pred_check
          %p318 = pneg %p69
        $region50: #{tpu_custom_call.1} parent=43 // pred_check_branch
          %320 = sbr.rel (%p318) target = $region52
        $region51: #{tpu_custom_call.1} parent=43 // pred_region
          %321 = dma.done %s314, 128
        $region52: #{tpu_custom_call.1} parent=43 // pred_fallthru
          _
        %s322 = sand.u32 %s27, 1
        %s323 = scalar_lea.sflag [#allocation7], %s322
        %s324 = sand.u32 %s82, 1
        %s325 = smul.addr %s324, 192
        %s326 = scalar_lea.vmem [#allocation8], %s325
        // Predicated region
        $region53: #{tpu_custom_call.1} parent=43 // pred_check
          %p327 = pneg %p95
        $region54: #{tpu_custom_call.1} parent=43 // pred_check_branch
          %329 = sbr.rel (%p327) target = $region56
        $region55: #{tpu_custom_call.1} parent=43 // pred_region
          %330 = dma.done %s323, 3072
        $region56: #{tpu_custom_call.1} parent=43 // pred_fallthru
          _
        %s331 = sand.u32 %s108, 1
        %s332 = scalar_lea.sflag [#allocation10], %s331
        %s333 = sand.u32 %s108, 1
        %s334 = smul.addr %s333, 192
        %s335 = scalar_lea.vmem [#allocation9], %s334
        // Predicated region
        $region57: #{tpu_custom_call.1} parent=43 // pred_check
          %p336 = pneg %p121
        $region58: #{tpu_custom_call.1} parent=43 // pred_check_branch
          %338 = sbr.rel (%p336) target = $region60
        $region59: #{tpu_custom_call.1} parent=43 // pred_region
          %339 = dma.done %s332, 3072
        $region60: #{tpu_custom_call.1} parent=43 // pred_fallthru
          _
        %p340 = pneg %p43
        %p341 = pneg %p40
        %s342 = sand.u32 %s27, 1
        %s343 = scalar_lea.sflag [#allocation7], %s342
        %s344 = sand.u32 %s56, 1
        %s345 = smul.addr %s344, 8
        %s346 = scalar_lea.vmem [#allocation6], %s345
        %p347 = pneg %p69
        %p348 = pneg %p66
        %s349 = sand.u32 %s27, 1
        %s350 = scalar_lea.sflag [#allocation7], %s349
        %s351 = sand.u32 %s82, 1
        %s352 = smul.addr %s351, 192
        %s353 = scalar_lea.vmem [#allocation8], %s352
        %p354 = pneg %p95
        %p355 = pneg %p92
        %s356 = sand.u32 %s108, 1
        %s357 = scalar_lea.sflag [#allocation10], %s356
        %s358 = sand.u32 %s108, 1
        %s359 = smul.addr %s358, 192
        %s360 = scalar_lea.vmem [#allocation9], %s359
        %p361 = pneg %p121
        %p362 = pneg %p118
        %p363 = scmp.lt.s32.totalorder %s27, 2
        %s364 = scalar_select %p363, %s27, 2
        %s365 = smul.addr %s364, 3
        %s366 = scalar_lea.vmem %s4, %s365
        %p367 = pneg %p147
        %p368 = pneg %p144
        %p369 = scmp.lt.s32.totalorder %s27, 2
        %s370 = scalar_select %p369, %s27, 2
        %s371 = scalar_lea.vmem %s5, %s370
        %p372 = pneg %p173
        %p373 = pneg %p170
        %p374 = pneg %p199
        %p375 = pneg %p196
        %s376 = sand.u32 %s186, 1
        %s377 = scalar_lea.sflag [#allocation5], %s376
        %s378 = sand.u32 %s186, 1
        %s379 = smul.addr %s378, 8
        %s380 = scalar_lea.vmem [#allocation11], %s379
        %p381 = scmp.lt.s32.totalorder %s27, 2
        %s382 = scalar_select %p381, %s27, 2
        %s383 = smul.addr %s382, 3
        %s384 = scalar_lea.vmem %s4, %s383
        %p385 = scmp.lt.s32.totalorder %s27, 2
        %s386 = scalar_select %p385, %s27, 2
        %s387 = scalar_lea.vmem %s5, %s386
        %p389 = scmp.eq.s32.totalorder %s27, 0
        // Predicated region
        $region61: #{tpu_custom_call.1} parent=43 // pred_check
          %p390 = pneg %p389
        $region62: #{tpu_custom_call.1} parent=43 // pred_check_branch
          %392 = sbr.rel (%p390) target = $region64
        $region63: #{tpu_custom_call.1} parent=43 // pred_region
          %v393 = vld [vmem:[#allocation3] sm:$0xf]
          %394 = vst [vmem:[#allocation2] sm:$0xf] %v393
        $region64: #{tpu_custom_call.1} parent=43 // pred_fallthru
          _
        %v395 = vld [vmem:[#allocation2] sm:$0xf]
        %v396 = vld [vmem:[%s317] sm:$0xff]
        %v397 = vld [vmem:[%s326] sm:$0xff]
        %v398 = vld [vmem:[%s326 + $0x8] sm:$0xf]
        %v399 = vld [vmem:[%s326 + $0xc] sm:$0xff]
        %v400 = vld [vmem:[%s326 + $0x14] sm:$0xf]
        %v401 = vld [vmem:[%s326 + $0x18] sm:$0xff]
        %v402 = vld [vmem:[%s326 + $0x20] sm:$0xf]
        %v403 = vld [vmem:[%s326 + $0x24] sm:$0xff]
        %v404 = vld [vmem:[%s326 + $0x2c] sm:$0xf]
        %v405 = vld [vmem:[%s326 + $0x30] sm:$0xff]
        %v406 = vld [vmem:[%s326 + $0x38] sm:$0xf]
        %v407 = vld [vmem:[%s326 + $0x3c] sm:$0xff]
        %v408 = vld [vmem:[%s326 + $0x44] sm:$0xf]
        %v409 = vld [vmem:[%s326 + $0x48] sm:$0xff]
        %v410 = vld [vmem:[%s326 + $0x50] sm:$0xf]
        %v411 = vld [vmem:[%s326 + $0x54] sm:$0xff]
        %v412 = vld [vmem:[%s326 + $0x5c] sm:$0xf]
        %v413 = vld [vmem:[%s326 + $0x60] sm:$0xff]
        %v414 = vld [vmem:[%s326 + $0x68] sm:$0xf]
        %v415 = vld [vmem:[%s326 + $0x6c] sm:$0xff]
        %v416 = vld [vmem:[%s326 + $0x74] sm:$0xf]
        %v417 = vld [vmem:[%s326 + $0x78] sm:$0xff]
        %v418 = vld [vmem:[%s326 + $0x80] sm:$0xf]
        %v419 = vld [vmem:[%s326 + $0x84] sm:$0xff]
        %v420 = vld [vmem:[%s326 + $0x8c] sm:$0xf]
        %v421 = vld [vmem:[%s326 + $0x90] sm:$0xff]
        %v422 = vld [vmem:[%s326 + $0x98] sm:$0xf]
        %v423 = vld [vmem:[%s326 + $0x9c] sm:$0xff]
        %v424 = vld [vmem:[%s326 + $0xa4] sm:$0xf]
        %v425 = vld [vmem:[%s326 + $0xa8] sm:$0xff]
        %v426 = vld [vmem:[%s326 + $0xb0] sm:$0xf]
        %v427 = vld [vmem:[%s326 + $0xb4] sm:$0xff]
        %v428 = vld [vmem:[%s326 + $0xbc] sm:$0xf]
        %v429 = vld [vmem:[%s335] sm:$0xff]
        %v430 = vld [vmem:[%s335 + $0x8] sm:$0xf]
        %v431 = vld [vmem:[%s335 + $0xc] sm:$0xff]
        %v432 = vld [vmem:[%s335 + $0x14] sm:$0xf]
        %v433 = vld [vmem:[%s335 + $0x18] sm:$0xff]
        %v434 = vld [vmem:[%s335 + $0x20] sm:$0xf]
        %v435 = vld [vmem:[%s335 + $0x24] sm:$0xff]
        %v436 = vld [vmem:[%s335 + $0x2c] sm:$0xf]
        %v437 = vld [vmem:[%s335 + $0x30] sm:$0xff]
        %v438 = vld [vmem:[%s335 + $0x38] sm:$0xf]
        %v439 = vld [vmem:[%s335 + $0x3c] sm:$0xff]
        %v440 = vld [vmem:[%s335 + $0x44] sm:$0xf]
        %v441 = vld [vmem:[%s335 + $0x48] sm:$0xff]
        %v442 = vld [vmem:[%s335 + $0x50] sm:$0xf]
        %v443 = vld [vmem:[%s335 + $0x54] sm:$0xff]
        %v444 = vld [vmem:[%s335 + $0x5c] sm:$0xf]
        %v445 = vld [vmem:[%s335 + $0x60] sm:$0xff]
        %v446 = vld [vmem:[%s335 + $0x68] sm:$0xf]
        %v447 = vld [vmem:[%s335 + $0x6c] sm:$0xff]
        %v448 = vld [vmem:[%s335 + $0x74] sm:$0xf]
        %v449 = vld [vmem:[%s335 + $0x78] sm:$0xff]
        %v450 = vld [vmem:[%s335 + $0x80] sm:$0xf]
        %v451 = vld [vmem:[%s335 + $0x84] sm:$0xff]
        %v452 = vld [vmem:[%s335 + $0x8c] sm:$0xf]
        %v453 = vld [vmem:[%s335 + $0x90] sm:$0xff]
        %v454 = vld [vmem:[%s335 + $0x98] sm:$0xf]
        %v455 = vld [vmem:[%s335 + $0x9c] sm:$0xff]
        %v456 = vld [vmem:[%s335 + $0xa4] sm:$0xf]
        %v457 = vld [vmem:[%s335 + $0xa8] sm:$0xff]
        %v458 = vld [vmem:[%s335 + $0xb0] sm:$0xf]
        %v459 = vld [vmem:[%s335 + $0xb4] sm:$0xff]
        %v460 = vld [vmem:[%s335 + $0xbc] sm:$0xf]
        %v461 = vld [vmem:[%s384] sm:$0x7]
        %v463 = vlaneseq
        %v464 = vshrl.u32 %v463, 7
        %v465 = vsub.s32 0, %v464
        %v466 = vrot.slane %v461, %v465
        %v467 = vlaneseq
        %v468 = vshrl.u32 %v467, 7
        %v469 = vsub.s32 1, %v468
        %v470 = vrot.slane %v461, %v469
        %v471 = vlaneseq
        %v472 = vshrl.u32 %v471, 7
        %v473 = vsub.s32 2, %v472
        %v474 = vrot.slane %v461, %v473
        %v510 = vunpack.c.l.b16 %v397
        %v511 = vunpack.c.h.b16 %v397
        %v512 = vunpack.c.l.b16 %v398
        %v513 = vunpack.c.l.b16 %v399
        %v514 = vunpack.c.h.b16 %v399
        %v515 = vunpack.c.l.b16 %v400
        %v516 = vunpack.c.l.b16 %v401
        %v517 = vunpack.c.h.b16 %v401
        %v518 = vunpack.c.l.b16 %v402
        %v519 = vunpack.c.l.b16 %v403
        %v520 = vunpack.c.h.b16 %v403
        %v521 = vunpack.c.l.b16 %v404
        %v522 = vunpack.c.l.b16 %v405
        %v523 = vunpack.c.h.b16 %v405
        %v524 = vunpack.c.l.b16 %v406
        %v525 = vunpack.c.l.b16 %v407
        %v526 = vunpack.c.h.b16 %v407
        %v527 = vunpack.c.l.b16 %v408
        %v528 = vunpack.c.l.b16 %v409
        %v529 = vunpack.c.h.b16 %v409
        %v530 = vunpack.c.l.b16 %v410
        %v531 = vunpack.c.l.b16 %v411
        %v532 = vunpack.c.h.b16 %v411
        %v533 = vunpack.c.l.b16 %v412
        %v534 = vunpack.c.l.b16 %v413
        %v535 = vunpack.c.h.b16 %v413
        %v536 = vunpack.c.l.b16 %v414
        %v537 = vunpack.c.l.b16 %v415
        %v538 = vunpack.c.h.b16 %v415
        %v539 = vunpack.c.l.b16 %v416
        %v540 = vunpack.c.l.b16 %v417
        %v541 = vunpack.c.h.b16 %v417
        %v542 = vunpack.c.l.b16 %v418
        %v543 = vunpack.c.l.b16 %v419
        %v544 = vunpack.c.h.b16 %v419
        %v545 = vunpack.c.l.b16 %v420
        %v546 = vunpack.c.l.b16 %v421
        %v547 = vunpack.c.h.b16 %v421
        %v548 = vunpack.c.l.b16 %v422
        %v549 = vunpack.c.l.b16 %v423
        %v550 = vunpack.c.h.b16 %v423
        %v551 = vunpack.c.l.b16 %v424
        %v552 = vunpack.c.l.b16 %v425
        %v553 = vunpack.c.h.b16 %v425
        %v554 = vunpack.c.l.b16 %v426
        %v555 = vunpack.c.l.b16 %v427
        %v556 = vunpack.c.h.b16 %v427
        %v557 = vunpack.c.l.b16 %v428
        %v558 = vpack.c.b16 %v513, %v510
        %v559 = vpack.c.b16 %v514, %v511
        %v560 = vpack.c.b16 %v515, %v512
        %v561 = vpack.c.b16 %v519, %v516
        %v562 = vpack.c.b16 %v520, %v517
        %v563 = vpack.c.b16 %v521, %v518
        %v564 = vpack.c.b16 %v525, %v522
        %v565 = vpack.c.b16 %v526, %v523
        %v566 = vpack.c.b16 %v527, %v524
        %v567 = vpack.c.b16 %v531, %v528
        %v568 = vpack.c.b16 %v532, %v529
        %v569 = vpack.c.b16 %v533, %v530
        %v570 = vpack.c.b16 %v537, %v534
        %v571 = vpack.c.b16 %v538, %v535
        %v572 = vpack.c.b16 %v539, %v536
        %v573 = vpack.c.b16 %v543, %v540
        %v574 = vpack.c.b16 %v544, %v541
        %v575 = vpack.c.b16 %v545, %v542
        %v576 = vpack.c.b16 %v549, %v546
        %v577 = vpack.c.b16 %v550, %v547
        %v578 = vpack.c.b16 %v551, %v548
        %v579 = vpack.c.b16 %v555, %v552
        %v580 = vpack.c.b16 %v556, %v553
        %v581 = vpack.c.b16 %v557, %v554
        %606 = vmatprep.subr.bf16.mxu0 %v559
        %607 = vmatpush1.bf16.msra.mxu0 %v558
        %608 = vmatprep.subr.bf16.mxu0 %v562
        %609 = vmatpush1.bf16.msra.mxu0 %v561
        %610 = vmatprep.subr.bf16.mxu0 %v565
        %611 = vmatpush1.bf16.msra.mxu0 %v564
        %612 = vmatprep.subr.bf16.mxu0 %v568
        %613 = vmatpush1.bf16.msra.mxu0 %v567
        %614 = vmatprep.subr.bf16.mxu0 %v571
        %615 = vmatpush1.bf16.msra.mxu0 %v570
        %616 = vmatprep.subr.bf16.mxu0 %v574
        %617 = vmatpush1.bf16.msra.mxu0 %v573
        %618 = vmatprep.subr.bf16.mxu0 %v577
        %619 = vmatpush1.bf16.msra.mxu0 %v576
        %620 = vmatprep.subr.bf16.mxu0 %v580
        %621 = vmatpush1.bf16.msra.mxu0 %v579
        %622 = vmatprep.subr.bf16.mxu0 0
        %623 = vmatpush1.bf16.msra.mxu0 0
        %624 = vmatprep.subr.bf16.mxu0 0
        %625 = vmatpush1.bf16.msra.mxu0 0
        %626 = vmatprep.subr.bf16.mxu0 0
        %627 = vmatpush1.bf16.msra.mxu0 0
        %628 = vmatprep.subr.bf16.mxu0 0
        %629 = vmatpush1.bf16.msra.mxu0 0
        %630 = vmatprep.subr.bf16.mxu0 0
        %631 = vmatpush1.bf16.msra.mxu0 0
        %632 = vmatprep.subr.bf16.mxu0 0
        %633 = vmatpush1.bf16.msra.mxu0 0
        %634 = vmatprep.subr.bf16.mxu0 0
        %635 = vmatpush1.bf16.msra.mxu0 0
        %636 = vmatprep.subr.bf16.mxu0 0
        %637 = vmatpush1.bf16.msra.mxu0 0
        %638 = vmatprep.mubr.bf16.mxu0 0
        %639 = vmatmul.mubr.bf16.gmra.mrb[0].mxu0 %v395
        %v640 = vpop.f32.mrb[0].mxu0
        %v641 = vadd.f32 %v466, %v640
        %v642 = vpop.f32.mrb[0].mxu0
        %v643 = vadd.f32 %v470, %v642
        %v644 = vpop.f32.mrb[0].mxu0
        %v645 = vpop.f32.mrb[0].mxu0
        %646 = vdwg.mxu0
        %647 = vmatprep.subr.bf16.mxu0 0
        %648 = vmatpush1.bf16.msra.mxu0 %v560
        %649 = vmatprep.subr.bf16.mxu0 0
        %650 = vmatpush1.bf16.msra.mxu0 %v563
        %651 = vmatprep.subr.bf16.mxu0 0
        %652 = vmatpush1.bf16.msra.mxu0 %v566
        %653 = vmatprep.subr.bf16.mxu0 0
        %654 = vmatpush1.bf16.msra.mxu0 %v569
        %655 = vmatprep.subr.bf16.mxu0 0
        %656 = vmatpush1.bf16.msra.mxu0 %v572
        %657 = vmatprep.subr.bf16.mxu0 0
        %658 = vmatpush1.bf16.msra.mxu0 %v575
        %659 = vmatprep.subr.bf16.mxu0 0
        %660 = vmatpush1.bf16.msra.mxu0 %v578
        %661 = vmatprep.subr.bf16.mxu0 0
        %662 = vmatpush1.bf16.msra.mxu0 %v581
        %663 = vmatprep.subr.bf16.mxu0 0
        %664 = vmatpush1.bf16.msra.mxu0 0
        %665 = vmatprep.subr.bf16.mxu0 0
        %666 = vmatpush1.bf16.msra.mxu0 0
        %667 = vmatprep.subr.bf16.mxu0 0
        %668 = vmatpush1.bf16.msra.mxu0 0
        %669 = vmatprep.subr.bf16.mxu0 0
        %670 = vmatpush1.bf16.msra.mxu0 0
        %671 = vmatprep.subr.bf16.mxu0 0
        %672 = vmatpush1.bf16.msra.mxu0 0
        %673 = vmatprep.subr.bf16.mxu0 0
        %674 = vmatpush1.bf16.msra.mxu0 0
        %675 = vmatprep.subr.bf16.mxu0 0
        %676 = vmatpush1.bf16.msra.mxu0 0
        %677 = vmatprep.subr.bf16.mxu0 0
        %678 = vmatpush1.bf16.msra.mxu0 0
        %679 = vmatprep.mubr.bf16.mxu0 0
        %680 = vmatmul.mubr.bf16.gmra.mrb[0].mxu0 %v395
        %v681 = vpop.f32.mrb[0].mxu0
        %v682 = vadd.f32 %v474, %v681
        %v683 = vpop.f32.mrb[0].mxu0
        %v684 = vpop.f32.mrb[0].mxu0
        %v685 = vpop.f32.mrb[0].mxu0
        %686 = vdwg.mxu0
        %v687 = vpack.c.bf16 %v396, %v396
        %v720 = vunpack.c.l.b16 %v429
        %v721 = vunpack.c.h.b16 %v429
        %v722 = vunpack.c.l.b16 %v430
        %v723 = vunpack.c.l.b16 %v431
        %v724 = vunpack.c.h.b16 %v431
        %v725 = vunpack.c.l.b16 %v432
        %v726 = vunpack.c.l.b16 %v433
        %v727 = vunpack.c.h.b16 %v433
        %v728 = vunpack.c.l.b16 %v434
        %v729 = vunpack.c.l.b16 %v435
        %v730 = vunpack.c.h.b16 %v435
        %v731 = vunpack.c.l.b16 %v436
        %v732 = vunpack.c.l.b16 %v437
        %v733 = vunpack.c.h.b16 %v437
        %v734 = vunpack.c.l.b16 %v438
        %v735 = vunpack.c.l.b16 %v439
        %v736 = vunpack.c.h.b16 %v439
        %v737 = vunpack.c.l.b16 %v440
        %v738 = vunpack.c.l.b16 %v441
        %v739 = vunpack.c.h.b16 %v441
        %v740 = vunpack.c.l.b16 %v442
        %v741 = vunpack.c.l.b16 %v443
        %v742 = vunpack.c.h.b16 %v443
        %v743 = vunpack.c.l.b16 %v444
        %v744 = vunpack.c.l.b16 %v445
        %v745 = vunpack.c.h.b16 %v445
        %v746 = vunpack.c.l.b16 %v446
        %v747 = vunpack.c.l.b16 %v447
        %v748 = vunpack.c.h.b16 %v447
        %v749 = vunpack.c.l.b16 %v448
        %v750 = vunpack.c.l.b16 %v449
        %v751 = vunpack.c.h.b16 %v449
        %v752 = vunpack.c.l.b16 %v450
        %v753 = vunpack.c.l.b16 %v451
        %v754 = vunpack.c.h.b16 %v451
        %v755 = vunpack.c.l.b16 %v452
        %v756 = vunpack.c.l.b16 %v453
        %v757 = vunpack.c.h.b16 %v453
        %v758 = vunpack.c.l.b16 %v454
        %v759 = vunpack.c.l.b16 %v455
        %v760 = vunpack.c.h.b16 %v455
        %v761 = vunpack.c.l.b16 %v456
        %v762 = vunpack.c.l.b16 %v457
        %v763 = vunpack.c.h.b16 %v457
        %v764 = vunpack.c.l.b16 %v458
        %v765 = vunpack.c.l.b16 %v459
        %v766 = vunpack.c.h.b16 %v459
        %v767 = vunpack.c.l.b16 %v460
        %v768 = vpack.c.b16 %v723, %v720
        %v769 = vpack.c.b16 %v724, %v721
        %v770 = vpack.c.b16 %v725, %v722
        %v771 = vpack.c.b16 %v729, %v726
        %v772 = vpack.c.b16 %v730, %v727
        %v773 = vpack.c.b16 %v731, %v728
        %v774 = vpack.c.b16 %v735, %v732
        %v775 = vpack.c.b16 %v736, %v733
        %v776 = vpack.c.b16 %v737, %v734
        %v777 = vpack.c.b16 %v741, %v738
        %v778 = vpack.c.b16 %v742, %v739
        %v779 = vpack.c.b16 %v743, %v740
        %v780 = vpack.c.b16 %v747, %v744
        %v781 = vpack.c.b16 %v748, %v745
        %v782 = vpack.c.b16 %v749, %v746
        %v783 = vpack.c.b16 %v753, %v750
        %v784 = vpack.c.b16 %v754, %v751
        %v785 = vpack.c.b16 %v755, %v752
        %v786 = vpack.c.b16 %v759, %v756
        %v787 = vpack.c.b16 %v760, %v757
        %v788 = vpack.c.b16 %v761, %v758
        %v789 = vpack.c.b16 %v765, %v762
        %v790 = vpack.c.b16 %v766, %v763
        %v791 = vpack.c.b16 %v767, %v764
        %816 = vmatprep.subr.bf16.mxu0 %v769
        %817 = vmatpush1.bf16.msra.mxu0 %v768
        %818 = vmatprep.subr.bf16.mxu0 %v772
        %819 = vmatpush1.bf16.msra.mxu0 %v771
        %820 = vmatprep.subr.bf16.mxu0 %v775
        %821 = vmatpush1.bf16.msra.mxu0 %v774
        %822 = vmatprep.subr.bf16.mxu0 %v778
        %823 = vmatpush1.bf16.msra.mxu0 %v777
        %824 = vmatprep.subr.bf16.mxu0 %v781
        %825 = vmatpush1.bf16.msra.mxu0 %v780
        %826 = vmatprep.subr.bf16.mxu0 %v784
        %827 = vmatpush1.bf16.msra.mxu0 %v783
        %828 = vmatprep.subr.bf16.mxu0 %v787
        %829 = vmatpush1.bf16.msra.mxu0 %v786
        %830 = vmatprep.subr.bf16.mxu0 %v790
        %831 = vmatpush1.bf16.msra.mxu0 %v789
        %832 = vmatprep.subr.bf16.mxu0 0
        %833 = vmatpush1.bf16.msra.mxu0 0
        %834 = vmatprep.subr.bf16.mxu0 0
        %835 = vmatpush1.bf16.msra.mxu0 0
        %836 = vmatprep.subr.bf16.mxu0 0
        %837 = vmatpush1.bf16.msra.mxu0 0
        %838 = vmatprep.subr.bf16.mxu0 0
        %839 = vmatpush1.bf16.msra.mxu0 0
        %840 = vmatprep.subr.bf16.mxu0 0
        %841 = vmatpush1.bf16.msra.mxu0 0
        %842 = vmatprep.subr.bf16.mxu0 0
        %843 = vmatpush1.bf16.msra.mxu0 0
        %844 = vmatprep.subr.bf16.mxu0 0
        %845 = vmatpush1.bf16.msra.mxu0 0
        %846 = vmatprep.subr.bf16.mxu0 0
        %847 = vmatpush1.bf16.msra.mxu0 0
        %848 = vmatprep.mubr.bf16.mxu0 0
        %849 = vmatmul.mubr.bf16.gmra.mrb[0].mxu0 %v687
        %v850 = vpop.f32.mrb[0].mxu0
        %v851 = vadd.f32 0.0, %v850
        %v852 = vpop.f32.mrb[0].mxu0
        %v853 = vadd.f32 0.0, %v852
        %v854 = vpop.f32.mrb[0].mxu0
        %v855 = vpop.f32.mrb[0].mxu0
        %856 = vdwg.mxu0
        %857 = vmatprep.subr.bf16.mxu0 0
        %858 = vmatpush1.bf16.msra.mxu0 %v770
        %859 = vmatprep.subr.bf16.mxu0 0
        %860 = vmatpush1.bf16.msra.mxu0 %v773
        %861 = vmatprep.subr.bf16.mxu0 0
        %862 = vmatpush1.bf16.msra.mxu0 %v776
        %863 = vmatprep.subr.bf16.mxu0 0
        %864 = vmatpush1.bf16.msra.mxu0 %v779
        %865 = vmatprep.subr.bf16.mxu0 0
        %866 = vmatpush1.bf16.msra.mxu0 %v782
        %867 = vmatprep.subr.bf16.mxu0 0
        %868 = vmatpush1.bf16.msra.mxu0 %v785
        %869 = vmatprep.subr.bf16.mxu0 0
        %870 = vmatpush1.bf16.msra.mxu0 %v788
        %871 = vmatprep.subr.bf16.mxu0 0
        %872 = vmatpush1.bf16.msra.mxu0 %v791
        %873 = vmatprep.subr.bf16.mxu0 0
        %874 = vmatpush1.bf16.msra.mxu0 0
        %875 = vmatprep.subr.bf16.mxu0 0
        %876 = vmatpush1.bf16.msra.mxu0 0
        %877 = vmatprep.subr.bf16.mxu0 0
        %878 = vmatpush1.bf16.msra.mxu0 0
        %879 = vmatprep.subr.bf16.mxu0 0
        %880 = vmatpush1.bf16.msra.mxu0 0
        %881 = vmatprep.subr.bf16.mxu0 0
        %882 = vmatpush1.bf16.msra.mxu0 0
        %883 = vmatprep.subr.bf16.mxu0 0
        %884 = vmatpush1.bf16.msra.mxu0 0
        %885 = vmatprep.subr.bf16.mxu0 0
        %886 = vmatpush1.bf16.msra.mxu0 0
        %887 = vmatprep.subr.bf16.mxu0 0
        %888 = vmatpush1.bf16.msra.mxu0 0
        %889 = vmatprep.mubr.bf16.mxu0 0
        %890 = vmatmul.mubr.bf16.gmra.mrb[0].mxu0 %v687
        %v891 = vpop.f32.mrb[0].mxu0
        %v892 = vadd.f32 0.0, %v891
        %v893 = vpop.f32.mrb[0].mxu0
        %v894 = vpop.f32.mrb[0].mxu0
        %v895 = vpop.f32.mrb[0].mxu0
        %896 = vdwg.mxu0
        %v897 = vadd.f32 %v641, %v851
        %v898 = vxor.u32 %v897, 2147483648
        %v899 = vmul.f32 %v898, 1.442695
        %v900 = vpow.pop %v899
        %v901 = vadd.f32 %v900, 1.0
        %v902 = vrcp.pop %v901
        %v903 = vmul.f32 1.0, %v902
        %v904 = vadd.f32 %v643, %v853
        %v905 = vxor.u32 %v904, 2147483648
        %v906 = vmul.f32 %v905, 1.442695
        %v907 = vpow.pop %v906
        %v908 = vadd.f32 %v907, 1.0
        %v909 = vrcp.pop %v908
        %v910 = vmul.f32 1.0, %v909
        %v911 = vld [vmem:[%s387] sm:$0x1]
        %v913 = vlaneseq
        %v914 = vshrl.u32 %v913, 7
        %v915 = vsub.s32 0, %v914
        %v916 = vrot.slane %v911, %v915
        %v918 = vadd.f32 %v892, %v916
        %v919 = vmul.f32 %v903, %v918
        %v920 = vadd.f32 %v682, %v919
        %v921 = vtanh.pop %v920
        %v922 = vsub.f32 1.0, %v910
        %v923 = vmul.f32 %v922, %v921
        %v924 = vmul.f32 %v910, %v396
        %v925 = vadd.f32 %v923, %v924
        %926 = vst [vmem:[%s380] sm:$0xff] %v925
        %s927 = sadd.s32 %s27, 1
        %p928 = scmp.lt.s32.totalorder %s927, 3
        // Predicated region
        $region65: #{tpu_custom_call.1} parent=43 // pred_check
          %p929 = pneg %p928
        $region66: #{tpu_custom_call.1} parent=43 // pred_check_branch
          %931 = sbr.rel (%p929) target = $region68
        $region67: #{tpu_custom_call.1} parent=43 // pred_region
          %v932 = vpack.c.bf16 %v925, %v925
          %933 = vst [vmem:[#allocation2] sm:$0xf] %v932
        $region68: #{tpu_custom_call.1} parent=43 // pred_fallthru
          _
        %s934 = sand.u32 %s186, 1
        %s935 = scalar_lea.sflag [#allocation5], %s934
        %s936 = sand.u32 %s186, 1
        %s937 = smul.addr %s936, 8
        %s938 = scalar_lea.vmem [#allocation11], %s937
        // Predicated region
        $region69: #{tpu_custom_call.1} parent=43 // pred_check
          %p939 = pneg %p196
        $region70: #{tpu_custom_call.1} parent=43 // pred_check_branch
          %941 = sbr.rel (%p939) target = $region72
        $region71: #{tpu_custom_call.1} parent=43 // pred_region
          %s943 = ssub.s32 128, 128
          %944 = vsyncadd %s935, %s943
          %s945 = smul.addr %s27, 128
          %s946 = scalar_lea.hbm %s6, %s945
          %s948 = sshll.u32 %s938, 4
          %s949 = int_to_ptr.vmem [resolvable:$true] %s948
          %951 = dma.vmem_to_hbm [thread:$0]  %s949, 128, %s946, %s935
        $region72: #{tpu_custom_call.1} parent=43 // pred_fallthru
          _
      $region44: #{tpu_custom_call.1} parent=5 // pred_fallthru
        _
      %p952 = scmp.le.s32.totalorder 2, %s22
      // Predicated region
      $region73: #{tpu_custom_call.1} parent=5 // pred_check
        %p953 = pneg %p952
      $region74: #{tpu_custom_call.1} parent=5 // pred_check_branch
        %955 = sbr.rel (%p953) target = $region76
      $region75: #{tpu_custom_call.1} parent=5 // pred_region
        %s956 = ssub.s32 %s22, 2
        // Predicated region
        $region77: #{tpu_custom_call.1} parent=75 // pred_check
          %p957 = pneg %p202
        $region78: #{tpu_custom_call.1} parent=75 // pred_check_branch
          %959 = sbr.rel (%p957) target = $region80
        $region79: #{tpu_custom_call.1} parent=75 // pred_region
          %s960 = sand.u32 %s187, 1
          %s961 = scalar_lea.sflag [#allocation5], %s960
          %s962 = sand.u32 %s187, 1
          %s963 = smul.addr %s962, 8
          %s964 = scalar_lea.vmem [#allocation11], %s963
          %965 = dma.done %s961, 128
        $region80: #{tpu_custom_call.1} parent=75 // pred_fallthru
          _
      $region76: #{tpu_custom_call.1} parent=5 // pred_fallthru
        _
    $region6: #{tpu_custom_call.1} parent=1 // loop_footer
      %s26 = sadd.s32 1, %s22
    $region7: #{tpu_custom_call.1} parent=1 // loop_footer_branch
      %21 = sbr.rel target = $region3
    $region8: #{tpu_custom_call.1} parent=1 // loop_exit
      _
    %966 = vsyncpa [#allocation4], 1
    %s967 = scalar_lea.sflag [#allocation4], 1
    %968 = vsyncpa %s967, 1
    %969 = vsyncpa [#allocation7], 1
    %s970 = scalar_lea.sflag [#allocation7], 1
    %971 = vsyncpa %s970, 1
    %972 = vsyncpa [#allocation10], 1
    %s973 = scalar_lea.sflag [#allocation10], 1
    %974 = vsyncpa %s973, 1
    %975 = vsyncpa [#allocation5], 1
    %s976 = scalar_lea.sflag [#allocation5], 1
    %977 = vsyncpa %s976, 1

</llo_original>
